<compile_context>
chip_gen: v5e
topology: v5e:2x2
jax: 0.10.0
libtpu: 0.0.40
codegen_flags: <defaults>
</compile_context>

<pallas_src>
import jax
import jax.numpy as jnp
from jax.experimental import pallas as pl
from jax.experimental.pallas import tpu as pltpu

# torch.get_default_dtype() == float32  ->  eps = 1e-6
EPS = 1e-6


def _diag_mask(n, bt):
    """Boolean mask, True on the i==j diagonal, full (n, n, bt) shape."""
    row = jax.lax.broadcasted_iota(jnp.int32, (n, n, bt), 0)
    col = jax.lax.broadcasted_iota(jnp.int32, (n, n, bt), 1)
    return row == col


def _dist_kernel(pos_ref, out_ref):
    """r_ij = sqrt(sum_d (x_i[d]-x_j[d])^2); diagonal forced to sqrt(eps)."""
    pos = pos_ref[...]                                   # (D, N, BT)
    _, n, bt = pos.shape
    diff = pos[:, :, None, :] - pos[:, None, :, :]       # (D, N, N, BT)
    dist2 = jnp.sum(diff * diff, axis=0)                 # (N, N, BT), >= 0
    eye = _diag_mask(n, bt)
    out_ref[...] = jnp.sqrt(jnp.where(eye, EPS, dist2)).astype(out_ref.dtype)


def _der1_kernel(pos_ref, out_ref):
    """d r_ij / d x_i = (x_i - x_j) / (r_ij + eps*delta_ij).  dist fused in."""
    pos = pos_ref[...]                                   # (D, N, BT)
    _, n, bt = pos.shape
    diff = pos[:, :, None, :] - pos[:, None, :, :]       # (D, N, N, BT)
    dist2 = jnp.sum(diff * diff, axis=0)                 # (N, N, BT)
    eye = _diag_mask(n, bt)
    dist = jnp.sqrt(jnp.where(eye, EPS, dist2))
    # TODO(synk): pl.reciprocal(..., approx=True) would move the divide to the
    # EUP slot; kept exact to preserve the 1e-5 tolerance vs the reference.
    invr = 1.0 / jnp.where(eye, dist + EPS, dist)
    out_ref[...] = (diff * invr[None]).astype(out_ref.dtype)


def _der2_kernel(pos_ref, out_ref):
    """d^2 r_ij / d x_i^2 = (sum_{d'!=d} diff_{d'}^2) / (r_ij^3 + eps*delta_ij)."""
    pos = pos_ref[...]                                   # (D, N, BT)
    _, n, bt = pos.shape
    diff = pos[:, :, None, :] - pos[:, None, :, :]       # (D, N, N, BT)
    diff_sq = diff * diff
    dist2 = jnp.sum(diff_sq, axis=0)                     # r^2, exactly 0 on diag
    eye = _diag_mask(n, bt)
    dist = jnp.sqrt(jnp.where(eye, EPS, dist2))
    r3 = dist * dist * dist
    invr3 = 1.0 / jnp.where(eye, r3 + EPS, r3)
    # sum_{d'!=d} diff_{d'}^2 == dist2 - diff_sq[d]  (dist2 already has 0 diag)
    out_ref[...] = ((dist2[None] - diff_sq) * invr3[None]).astype(out_ref.dtype)


def _pick_batch_tile(nbatch, nelec, ndim, derivative):
    """Largest lane-dense (multiple of 128) batch tile that divides nbatch and
    fits a conservative VMEM budget (safe for v5e 16 MiB scoped / v7x 64 MiB),
    preferring >= 2 grid steps so v7x can use both TensorCores."""
    out_ch = ndim if derivative else 1
    # double-buffered in/out blocks + in-kernel temporaries (diff, diff^2, masks)
    per_b = 4 * (2 * (nelec * ndim + out_ch * nelec * nelec)
                 + (2 * ndim + 4) * nelec * nelec)
    cap = max(128, (12 * 1024 * 1024) // per_b)
    lane_tiles = [bt for bt in range(128, nbatch + 1, 128)
                  if nbatch % bt == 0 and bt <= cap]
    if lane_tiles:
        multi = [bt for bt in lane_tiles if nbatch // bt >= 2]
        return max(multi) if multi else max(lane_tiles)
    # Small / odd batch: one block spanning the full batch axis (block dim ==
    # full array dim is always legal, just not lane-dense).
    return nbatch


def electron_electron_distance(pos_flat, nelec, ndim=3, derivative=0):
    """Pallas equivalent of ElectronElectronDistance(nelec, ndim).forward(pos, derivative).

    pos_flat: (Nbatch, Nelec*Ndim) float32
    """
    # TODO(synk): scale=True path (get_scaled_distance & friends) lives in an
    # external qmctorch module not provided here; only scale=False is implemented.
    if derivative not in (0, 1, 2):
        raise ValueError("derivative must be 0, 1 or 2")

    nbatch = pos_flat.shape[0]
    dtype = pos_flat.dtype
    # Lane-dense layout: electrons on sublanes, batch on lanes -> (D, N, B).
    pos_t = jnp.transpose(pos_flat.reshape(nbatch, nelec, ndim), (2, 1, 0))

    bt = _pick_batch_tile(nbatch, nelec, ndim, derivative)
    grid = (nbatch // bt,)
    cparams = pltpu.CompilerParams(
        dimension_semantics=("parallel",),
        vmem_limit_bytes=32 * 1024 * 1024,
    )
    in_specs = [pl.BlockSpec((ndim, nelec, bt), lambda b: (0, 0, b))]

    if derivative == 0:
        out = pl.pallas_call(
            _dist_kernel,
            out_shape=jax.ShapeDtypeStruct((nelec, nelec, nbatch), dtype),
            grid=grid,
            in_specs=in_specs,
            out_specs=pl.BlockSpec((nelec, nelec, bt), lambda b: (0, 0, b)),
            compiler_params=cparams,
        )(pos_t)
        return jnp.transpose(out, (2, 0, 1))                       # (B, N, N)

    kernel = _der1_kernel if derivative == 1 else _der2_kernel
    out = pl.pallas_call(
        kernel,
        out_shape=jax.ShapeDtypeStruct((ndim, nelec, nelec, nbatch), dtype),
        grid=grid,
        in_specs=in_specs,
        out_specs=pl.BlockSpec((ndim, nelec, nelec, bt), lambda b: (0, 0, 0, b)),
        compiler_params=cparams,
    )(pos_t)
    return jnp.transpose(out, (3, 0, 1, 2))                        # (B, D, N, N)


# ---------------- pure-JAX reference (mirrors the PyTorch module) ----------------
# The torch module computes dist^2 via the quadratic expansion; mathematically it
# is identical to the sum of squared differences used here (the exact formula),
# differing only by fp32 round-off, so the reference uses the exact form.
def _ref_forward(pos_flat, nelec, ndim, derivative=0):
    pos = pos_flat.reshape(-1, nelec, ndim)
    diff = pos[:, :, None, :] - pos[:, None, :, :]                 # (B,N,N,D)
    dist2 = jnp.sum(diff ** 2, axis=-1)                            # (B,N,N)
    eye = jnp.eye(nelec, dtype=bool)
    dist = jnp.sqrt(jnp.where(eye, EPS, dist2))
    if derivative == 0:
        return dist
    diff_t = jnp.moveaxis(diff, -1, 1)                             # (B,D,N,N)
    if derivative == 1:
        invr = 1.0 / jnp.where(eye, dist + EPS, dist)
        return diff_t * invr[:, None]
    r3 = dist ** 3
    invr3 = 1.0 / jnp.where(eye, r3 + EPS, r3)
    diff_sq = diff_t ** 2
    total = jnp.sum(diff_sq, axis=1, keepdims=True)
    return (total - diff_sq) * invr3[:, None]


if __name__ == "__main__":
    nbatch, nelec, ndim = 256, 8, 3
    key = jax.random.PRNGKey(0)
    # positions: Nbatch x (Nelec * Ndim), like the PyTorch module's input
    pos_flat = jax.random.normal(key, (nbatch, nelec * ndim), dtype=jnp.float32)

    r = jax.block_until_ready(
        electron_electron_distance(pos_flat, nelec, ndim, derivative=0))
    dr = jax.block_until_ready(
        electron_electron_distance(pos_flat, nelec, ndim, derivative=1))
    d2r = jax.block_until_ready(
        electron_electron_distance(pos_flat, nelec, ndim, derivative=2))

    assert r.shape == (nbatch, nelec, nelec)
    assert dr.shape == (nbatch, ndim, nelec, nelec)
    assert d2r.shape == (nbatch, ndim, nelec, nelec)

    r_ref = _ref_forward(pos_flat, nelec, ndim, 0)
    dr_ref = _ref_forward(pos_flat, nelec, ndim, 1)
    d2r_ref = _ref_forward(pos_flat, nelec, ndim, 2)

    assert jnp.allclose(r, r_ref, atol=1e-5, rtol=1e-5)
    assert jnp.allclose(dr, dr_ref, atol=1e-5, rtol=1e-5)
    assert jnp.allclose(d2r, d2r_ref, atol=1e-4, rtol=1e-4)

    print("KERNEL_OK")
</pallas_src>

<mosaic_0001>
module attributes {stable_mosaic.version = 11 : i64} {
  func.func @_dist_kernel(%arg0: i32, %arg1: memref<3x8x128xf32, #tpu.memory_space<vmem>>, %arg2: memref<8x8x128xf32, #tpu.memory_space<vmem>>) attributes {dimension_semantics = [#tpu.dimension_semantics<parallel>], iteration_bounds = array<i64: 2>, scalar_prefetch = 0 : i64, scratch_operands = 0 : i64, tpu.core_type = #tpu.core_type<tc>, window_params = [{transform_indices = @transform_0, window_bounds = array<i64: 3, 8, 128>}, {transform_indices = @transform_1, window_bounds = array<i64: 8, 8, 128>}]} {
    %c0 = arith.constant 0 : index
    %c0_0 = arith.constant 0 : index
    %c0_1 = arith.constant 0 : index
    %0 = vector.load %arg1[%c0, %c0_0, %c0_1] : memref<3x8x128xf32, #tpu.memory_space<vmem>>, vector<3x8x128xf32>
    %1 = vector.shape_cast %0 : vector<3x8x128xf32> to vector<3x8x1x128xf32>
    %2 = vector.shape_cast %0 : vector<3x8x128xf32> to vector<3x1x8x128xf32>
    %3 = vector.broadcast %1 : vector<3x8x1x128xf32> to vector<3x8x8x128xf32>
    %4 = vector.broadcast %2 : vector<3x1x8x128xf32> to vector<3x8x8x128xf32>
    %5 = arith.subf %3, %4 : vector<3x8x8x128xf32>
    %6 = arith.mulf %5, %5 : vector<3x8x8x128xf32>
    %cst = arith.constant dense<0.000000e+00> : vector<8x8x128xf32>
    %7 = vector.multi_reduction <add>, %6, %cst [0] : vector<3x8x8x128xf32> to vector<8x8x128xf32>
    %8 = tpu.iota {dimensions = array<i32: 0>} : vector<8x8x128xi32>
    %9 = tpu.iota {dimensions = array<i32: 1>} : vector<8x8x128xi32>
    %10 = arith.cmpi eq, %8, %9 : vector<8x8x128xi32>
    %cst_2 = arith.constant 9.99999997E-7 : f32
    %11 = vector.broadcast %cst_2 : f32 to vector<8x8x128xf32>
    %12 = arith.select %10, %11, %7 : vector<8x8x128xi1>, vector<8x8x128xf32>
    %13 = math.sqrt %12 : vector<8x8x128xf32>
    %c0_3 = arith.constant 0 : index
    %c0_4 = arith.constant 0 : index
    %c0_5 = arith.constant 0 : index
    %14 = vector.load %arg2[%c0_3, %c0_4, %c0_5] : memref<8x8x128xf32, #tpu.memory_space<vmem>>, vector<8x8x128xf32>
    tpu.vector_store %arg2[%c0_3, %c0_4, %c0_5], %13 {strides = array<i32>} : memref<8x8x128xf32, #tpu.memory_space<vmem>>, vector<8x8x128xf32>,
    return
  }
  func.func @transform_0(%arg0: i32) -> (i32, i32, i32) {
    %c0_i32 = arith.constant 0 : i32
    %c0_i32_0 = arith.constant 0 : i32
    %c0_i32_1 = arith.constant 0 : i32
    return %c0_i32, %c0_i32_0, %arg0 : i32, i32, i32
  }
  func.func @transform_1(%arg0: i32) -> (i32, i32, i32) {
    %c0_i32 = arith.constant 0 : i32
    %c0_i32_0 = arith.constant 0 : i32
    %c0_i32_1 = arith.constant 0 : i32
    return %c0_i32, %c0_i32_0, %arg0 : i32, i32, i32
  }
}

</mosaic_0001>

<llo_original>
// kernel: tpu_custom_call.1
$region0: #{tpu_custom_call.1}
  #allocation0 [shape = 'u32[]', space=smem, size = 0x4, offset = 0x4, fixed_abs, tag = 'smem constant byte address 0x4 - core index']
  #allocation1 [shape = 'u32[72,128]{1,0:T(1,128)}', space=vmem, size = 0x9000, scoped, tag = 'internal scratch']
  %s0 = inlined_call_operand.hbm [shape: f32[3,8,256], index: 0, kind: input, shape index: {}]
  %s1 = inlined_call_operand.hbm [shape: f32[8,8,256], index: 1, kind: output, shape index: {}]
  %s2 = sld [smem:[#allocation0]]
  $region41: #{tpu_custom_call.1} parent=0
    _
  %s4 = ssub.s32 1, %s2
  %s5 = scalar_select 0, %s4, %s2
  $region1: #{tpu_custom_call.1} parent=0
    #allocation2 [shape = 'u8[24576]{0}', space=vmem, size = 0x6000, scoped, tag = 'input window, operand 0']
    #allocation3 [shape = 's32[2]{0}', space=sflag, size = 0x8, scoped, tag = 'scoped memory for tpu_custom_call.1']
    #allocation4 [shape = 's32[2]{0}', space=sflag, size = 0x8, scoped, tag = 'scoped memory for tpu_custom_call.1']
    #allocation5 [shape = 'u8[65536]{0}', space=vmem, size = 0x10000, scoped, tag = 'output window, operand 0']
    %6 = vsyncpa [#allocation3], 0
    %s7 = scalar_lea.sflag [#allocation3], 1
    %8 = vsyncpa %s7, 0
    %9 = vsyncpa [#allocation4], 0
    %s10 = scalar_lea.sflag [#allocation4], 1
    %11 = vsyncpa %s10, 0
    loop: start=0, step=1, limit=4
    $region2: #{tpu_custom_call.1} parent=1 // loop_pre_header
      _
    $region3: #{tpu_custom_call.1} parent=1 // loop_header
      %s13 = sphi 0, %s17
      %p14 = scmp.ge.s32.totalorder %s13, 4
      %s23 = sphi 0, %s25
      %s26 = sphi 0, %s23
      %s27 = sphi 0, %s26
      %s43 = sphi 0, %s27
      %s49 = sphi 0, %s51
      %s52 = sphi 0, %s49
      %s53 = sphi 0, %s52
      %s69 = sphi 0, %s53
    $region4: #{tpu_custom_call.1} parent=1 // loop_header_branch
      %16 = sbr.rel (%p14) target = $region8
    $region5: #{tpu_custom_call.1} parent=1 // loop_body
      %s18 = ssub.s32 %s13, 1
      %s19 = ssub.s32 %s13, 2
      %s20 = sadd.s32 %s13, 1
      %s21 = ssub.s32 %s13, %s20
      %p22 = scmp.eq.s32.totalorder %s21, 0
      %s24 = sadd.s32 %s23, 1
      %s25 = scalar_select %p22, %s23, %s24
      %p28 = pneg %p22
      %p29 = scmp.eq.s32.totalorder %s13, 1
      %p30 = por %p28, %p29
      %p31 = scmp.ne.s32.totalorder %s23, %s26
      %p32 = scmp.eq.s32.totalorder %s13, 0
      %p33 = por %p31, %p32
      %p34 = scmp.ne.s32.totalorder %s23, %s26
      %p35 = scmp.eq.s32.totalorder %s18, 1
      %p36 = por %p34, %p35
      %p37 = scmp.ne.s32.totalorder %s26, %s27
      %p38 = scmp.eq.s32.totalorder %s18, 0
      %p39 = por %p37, %p38
      %p40 = scmp.ne.s32.totalorder %s26, %s27
      %p41 = scmp.eq.s32.totalorder %s19, 1
      %p42 = por %p40, %p41
      %p44 = scmp.ne.s32.totalorder %s27, %s43
      %p45 = scmp.eq.s32.totalorder %s19, 0
      %p46 = por %p44, %p45
      %s47 = ssub.s32 %s13, %s20
      %p48 = scmp.eq.s32.totalorder %s47, 0
      %s50 = sadd.s32 %s49, 1
      %s51 = scalar_select %p48, %s49, %s50
      %p54 = pneg %p48
      %p55 = scmp.eq.s32.totalorder %s13, 1
      %p56 = por %p54, %p55
      %p57 = scmp.ne.s32.totalorder %s49, %s52
      %p58 = scmp.eq.s32.totalorder %s13, 0
      %p59 = por %p57, %p58
      %p60 = scmp.ne.s32.totalorder %s49, %s52
      %p61 = scmp.eq.s32.totalorder %s18, 1
      %p62 = por %p60, %p61
      %p63 = scmp.ne.s32.totalorder %s52, %s53
      %p64 = scmp.eq.s32.totalorder %s18, 0
      %p65 = por %p63, %p64
      %p66 = scmp.ne.s32.totalorder %s52, %s53
      %p67 = scmp.eq.s32.totalorder %s19, 1
      %p68 = por %p66, %p67
      %p70 = scmp.ne.s32.totalorder %s53, %s69
      %p71 = scmp.eq.s32.totalorder %s19, 0
      %p72 = por %p70, %p71
      %p73 = scmp.le.s32.totalorder 1, %s13
      %p74 = scmp.lt.s32.totalorder %s13, 3
      %p75 = pnand %p73, %p74
      %p76 = pneg %p75
      // Predicated region
      $region9: #{tpu_custom_call.1} parent=5 // pred_check
        _
      $region10: #{tpu_custom_call.1} parent=5 // pred_check_branch
        %78 = sbr.rel (%p75) target = $region12
      $region11: #{tpu_custom_call.1} parent=5 // pred_region
        %s79 = ssub.s32 %s13, 1
      $region12: #{tpu_custom_call.1} parent=5 // pred_fallthru
        _
      %p80 = scmp.lt.s32.totalorder %s13, 2
      // Predicated region
      $region13: #{tpu_custom_call.1} parent=5 // pred_check
        %p81 = pneg %p80
      $region14: #{tpu_custom_call.1} parent=5 // pred_check_branch
        %83 = sbr.rel (%p81) target = $region16
      $region15: #{tpu_custom_call.1} parent=5 // pred_region
        // Predicated region
        $region17: #{tpu_custom_call.1} parent=15 // pred_check
          %p84 = pneg %p33
        $region18: #{tpu_custom_call.1} parent=15 // pred_check_branch
          %86 = sbr.rel (%p84) target = $region20
        $region19: #{tpu_custom_call.1} parent=15 // pred_region
          %s87 = sand.u32 %s23, 1
          %s88 = scalar_lea.sflag [#allocation3], %s87
          %s89 = sand.u32 %s23, 1
          %s90 = smul.addr %s89, 24
          %s91 = scalar_lea.vmem [#allocation2], %s90
          %93 = vsyncadd %s88, 0
          %s94 = smul.addr %s13, 8
          %s95 = scalar_lea.hbm %s0, %s94
          %s96 = sshll.u32 %s95, 4
          %s97 = int_to_ptr.hbm [resolvable:$true] %s96
          %s98 = sshll.u32 %s91, 4
          %s99 = int_to_ptr.vmem [resolvable:$true] %s98
          %104 = dma.hbm_to_vmem [thread:$0]  %s97, 384, %s99, %s88, 256, 128, 8
        $region20: #{tpu_custom_call.1} parent=15 // pred_fallthru
          _
      $region16: #{tpu_custom_call.1} parent=5 // pred_fallthru
        _
      %p105 = scmp.le.s32.totalorder 1, %s13
      %p106 = scmp.lt.s32.totalorder %s13, 3
      %p107 = pnand %p105, %p106
      %p108 = pneg %p107
      // Predicated region
      $region21: #{tpu_custom_call.1} parent=5 // pred_check
        _
      $region22: #{tpu_custom_call.1} parent=5 // pred_check_branch
        %110 = sbr.rel (%p107) target = $region24
      $region23: #{tpu_custom_call.1} parent=5 // pred_region
        %s111 = ssub.s32 %s13, 1
        %s112 = sand.u32 %s26, 1
        %s113 = scalar_lea.sflag [#allocation3], %s112
        %s114 = sand.u32 %s26, 1
        %s115 = smul.addr %s114, 24
        %s116 = scalar_lea.vmem [#allocation2], %s115
        // Predicated region
        $region25: #{tpu_custom_call.1} parent=23 // pred_check
          %p117 = pneg %p39
        $region26: #{tpu_custom_call.1} parent=23 // pred_check_branch
          %119 = sbr.rel (%p117) target = $region28
        $region27: #{tpu_custom_call.1} parent=23 // pred_region
          %121 = dma.done %s113, 384
        $region28: #{tpu_custom_call.1} parent=23 // pred_fallthru
          _
        %s122 = sand.u32 %s26, 1
        %s123 = scalar_lea.sflag [#allocation3], %s122
        %s124 = sand.u32 %s26, 1
        %s125 = smul.addr %s124, 24
        %s126 = scalar_lea.vmem [#allocation2], %s125
        %p127 = pneg %p39
        %p128 = pneg %p36
        %p129 = pneg %p65
        %p130 = pneg %p62
        %s131 = sand.u32 %s52, 1
        %s132 = scalar_lea.sflag [#allocation4], %s131
        %s133 = sand.u32 %s52, 1
        %s134 = smul.addr %s133, 64
        %s135 = scalar_lea.vmem [#allocation5], %s134
        %v136 = vld [vmem:[%s116] sm:$0xff]
        %v137 = vld [vmem:[%s116 + $0x8] sm:$0xff]
        %v138 = vld [vmem:[%s116 + $0x10] sm:$0xff]
        %v142 = vrot.slane %v136, 1
        %v143 = vrot.slane %v136, 2
        %v144 = vrot.slane %v136, 3
        %v145 = vrot.slane %v136, 4
        %v146 = vrot.slane %v136, 5
        %v147 = vrot.slane %v136, 6
        %v148 = vrot.slane %v136, 7
        %v149 = vrot.slane %v137, 1
        %v150 = vrot.slane %v137, 2
        %v151 = vrot.slane %v137, 3
        %v152 = vrot.slane %v137, 4
        %v153 = vrot.slane %v137, 5
        %v154 = vrot.slane %v137, 6
        %v155 = vrot.slane %v137, 7
        %v156 = vrot.slane %v138, 1
        %v157 = vrot.slane %v138, 2
        %v158 = vrot.slane %v138, 3
        %v159 = vrot.slane %v138, 4
        %v160 = vrot.slane %v138, 5
        %v161 = vrot.slane %v138, 6
        %v162 = vrot.slane %v138, 7
        %v163 = vperm.slane %v136, 0
        %v164 = vperm.slane %v142, 0
        %v165 = vperm.slane %v143, 0
        %v166 = vperm.slane %v144, 0
        %v167 = vperm.slane %v145, 0
        %v168 = vperm.slane %v146, 0
        %v169 = vperm.slane %v147, 0
        %v170 = vperm.slane %v148, 0
        %v171 = vperm.slane %v137, 0
        %v172 = vperm.slane %v149, 0
        %v173 = vperm.slane %v150, 0
        %v174 = vperm.slane %v151, 0
        %v175 = vperm.slane %v152, 0
        %v176 = vperm.slane %v153, 0
        %v177 = vperm.slane %v154, 0
        %v178 = vperm.slane %v155, 0
        %v179 = vperm.slane %v138, 0
        %v180 = vperm.slane %v156, 0
        %v181 = vperm.slane %v157, 0
        %v182 = vperm.slane %v158, 0
        %v183 = vperm.slane %v159, 0
        %v184 = vperm.slane %v160, 0
        %v185 = vperm.slane %v161, 0
        %v186 = vperm.slane %v162, 0
        %v211 = vsub.f32 %v163, %v136
        %v212 = vsub.f32 %v164, %v136
        %v213 = vsub.f32 %v165, %v136
        %v214 = vsub.f32 %v166, %v136
        %v215 = vsub.f32 %v167, %v136
        %v216 = vsub.f32 %v168, %v136
        %v217 = vsub.f32 %v169, %v136
        %v218 = vsub.f32 %v170, %v136
        %v219 = vsub.f32 %v171, %v137
        %v220 = vsub.f32 %v172, %v137
        %v221 = vsub.f32 %v173, %v137
        %v222 = vsub.f32 %v174, %v137
        %v223 = vsub.f32 %v175, %v137
        %v224 = vsub.f32 %v176, %v137
        %v225 = vsub.f32 %v177, %v137
        %v226 = vsub.f32 %v178, %v137
        %v227 = vsub.f32 %v179, %v138
        %v228 = vsub.f32 %v180, %v138
        %v229 = vsub.f32 %v181, %v138
        %v230 = vsub.f32 %v182, %v138
        %v231 = vsub.f32 %v183, %v138
        %v232 = vsub.f32 %v184, %v138
        %v233 = vsub.f32 %v185, %v138
        %v234 = vsub.f32 %v186, %v138
        %v235 = vmul.f32 %v211, %v211
        %v236 = vmul.f32 %v212, %v212
        %v237 = vmul.f32 %v213, %v213
        %v238 = vmul.f32 %v214, %v214
        %v239 = vmul.f32 %v215, %v215
        %v240 = vmul.f32 %v216, %v216
        %v241 = vmul.f32 %v217, %v217
        %v242 = vmul.f32 %v218, %v218
        %v243 = vmul.f32 %v219, %v219
        %v244 = vmul.f32 %v220, %v220
        %v245 = vmul.f32 %v221, %v221
        %v246 = vmul.f32 %v222, %v222
        %v247 = vmul.f32 %v223, %v223
        %v248 = vmul.f32 %v224, %v224
        %v249 = vmul.f32 %v225, %v225
        %v250 = vmul.f32 %v226, %v226
        %v251 = vmul.f32 %v227, %v227
        %v252 = vmul.f32 %v228, %v228
        %v253 = vmul.f32 %v229, %v229
        %v254 = vmul.f32 %v230, %v230
        %v255 = vmul.f32 %v231, %v231
        %v256 = vmul.f32 %v232, %v232
        %v257 = vmul.f32 %v233, %v233
        %v258 = vmul.f32 %v234, %v234
        %v259 = vadd.f32 %v235, %v243
        %v260 = vadd.f32 %v259, %v251
        %v261 = vadd.f32 %v236, %v244
        %v262 = vadd.f32 %v261, %v252
        %v263 = vadd.f32 %v237, %v245
        %v264 = vadd.f32 %v263, %v253
        %v265 = vadd.f32 %v238, %v246
        %v266 = vadd.f32 %v265, %v254
        %v267 = vadd.f32 %v239, %v247
        %v268 = vadd.f32 %v267, %v255
        %v269 = vadd.f32 %v240, %v248
        %v270 = vadd.f32 %v269, %v256
        %v271 = vadd.f32 %v241, %v249
        %v272 = vadd.f32 %v271, %v257
        %v273 = vadd.f32 %v242, %v250
        %v274 = vadd.f32 %v273, %v258
        %v275 = vlaneseq
        %v276 = vshrl.u32 %v275, 7
        %vm277 = vcmp.eq.s32.totalorder %v276, 0
        %vm278 = vcmp.eq.s32.totalorder %v276, 1
        %vm279 = vcmp.eq.s32.totalorder %v276, 2
        %vm280 = vcmp.eq.s32.totalorder %v276, 3
        %vm281 = vcmp.eq.s32.totalorder %v276, 4
        %vm282 = vcmp.eq.s32.totalorder %v276, 5
        %vm283 = vcmp.eq.s32.totalorder %v276, 6
        %vm284 = vcmp.eq.s32.totalorder %v276, 7
        %v285 = vsel %vm277, 1e-06, %v260
        %v286 = vsel %vm278, 1e-06, %v262
        %v287 = vsel %vm279, 1e-06, %v264
        %v288 = vsel %vm280, 1e-06, %v266
        %v289 = vsel %vm281, 1e-06, %v268
        %v290 = vsel %vm282, 1e-06, %v270
        %v291 = vsel %vm283, 1e-06, %v272
        %v292 = vsel %vm284, 1e-06, %v274
        %v293 = vrsqrt.pop %v285
        %v294 = vmul.f32 %v293, %v285
        %v295 = vmul.f32 %v294, %v293
        %v296 = vmul.f32 0.5, %v295
        %v297 = vsub.f32 1.5, %v296
        %v298 = vmul.f32 %v293, %v297
        %v299 = vmul.f32 %v285, %v298
        %vm300 = vcmp.eq.f32.partialorder %v285, inf
        %v301 = vsel %vm300, %v285, %v299
        %vm302 = vcmp.eq.f32.partialorder %v285, 0.0
        %v303 = vand.u32 %v285, 2147483648
        %v304 = vsel %vm302, %v303, %v301
        %v305 = vrsqrt.pop %v286
        %v306 = vmul.f32 %v305, %v286
        %v307 = vmul.f32 %v306, %v305
        %v308 = vmul.f32 0.5, %v307
        %v309 = vsub.f32 1.5, %v308
        %v310 = vmul.f32 %v305, %v309
        %v311 = vmul.f32 %v286, %v310
        %vm312 = vcmp.eq.f32.partialorder %v286, inf
        %v313 = vsel %vm312, %v286, %v311
        %vm314 = vcmp.eq.f32.partialorder %v286, 0.0
        %v315 = vand.u32 %v286, 2147483648
        %v316 = vsel %vm314, %v315, %v313
        %v317 = vrsqrt.pop %v287
        %v318 = vmul.f32 %v317, %v287
        %v319 = vmul.f32 %v318, %v317
        %v320 = vmul.f32 0.5, %v319
        %v321 = vsub.f32 1.5, %v320
        %v322 = vmul.f32 %v317, %v321
        %v323 = vmul.f32 %v287, %v322
        %vm324 = vcmp.eq.f32.partialorder %v287, inf
        %v325 = vsel %vm324, %v287, %v323
        %vm326 = vcmp.eq.f32.partialorder %v287, 0.0
        %v327 = vand.u32 %v287, 2147483648
        %v328 = vsel %vm326, %v327, %v325
        %v329 = vrsqrt.pop %v288
        %v330 = vmul.f32 %v329, %v288
        %v331 = vmul.f32 %v330, %v329
        %v332 = vmul.f32 0.5, %v331
        %v333 = vsub.f32 1.5, %v332
        %v334 = vmul.f32 %v329, %v333
        %v335 = vmul.f32 %v288, %v334
        %vm336 = vcmp.eq.f32.partialorder %v288, inf
        %v337 = vsel %vm336, %v288, %v335
        %vm338 = vcmp.eq.f32.partialorder %v288, 0.0
        %v339 = vand.u32 %v288, 2147483648
        %v340 = vsel %vm338, %v339, %v337
        %v341 = vrsqrt.pop %v289
        %v342 = vmul.f32 %v341, %v289
        %v343 = vmul.f32 %v342, %v341
        %v344 = vmul.f32 0.5, %v343
        %v345 = vsub.f32 1.5, %v344
        %v346 = vmul.f32 %v341, %v345
        %v347 = vmul.f32 %v289, %v346
        %vm348 = vcmp.eq.f32.partialorder %v289, inf
        %v349 = vsel %vm348, %v289, %v347
        %vm350 = vcmp.eq.f32.partialorder %v289, 0.0
        %v351 = vand.u32 %v289, 2147483648
        %v352 = vsel %vm350, %v351, %v349
        %v353 = vrsqrt.pop %v290
        %v354 = vmul.f32 %v353, %v290
        %v355 = vmul.f32 %v354, %v353
        %v356 = vmul.f32 0.5, %v355
        %v357 = vsub.f32 1.5, %v356
        %v358 = vmul.f32 %v353, %v357
        %v359 = vmul.f32 %v290, %v358
        %vm360 = vcmp.eq.f32.partialorder %v290, inf
        %v361 = vsel %vm360, %v290, %v359
        %vm362 = vcmp.eq.f32.partialorder %v290, 0.0
        %v363 = vand.u32 %v290, 2147483648
        %v364 = vsel %vm362, %v363, %v361
        %v365 = vrsqrt.pop %v291
        %v366 = vmul.f32 %v365, %v291
        %v367 = vmul.f32 %v366, %v365
        %v368 = vmul.f32 0.5, %v367
        %v369 = vsub.f32 1.5, %v368
        %v370 = vmul.f32 %v365, %v369
        %v371 = vmul.f32 %v291, %v370
        %vm372 = vcmp.eq.f32.partialorder %v291, inf
        %v373 = vsel %vm372, %v291, %v371
        %vm374 = vcmp.eq.f32.partialorder %v291, 0.0
        %v375 = vand.u32 %v291, 2147483648
        %v376 = vsel %vm374, %v375, %v373
        %v377 = vrsqrt.pop %v292
        %v378 = vmul.f32 %v377, %v292
        %v379 = vmul.f32 %v378, %v377
        %v380 = vmul.f32 0.5, %v379
        %v381 = vsub.f32 1.5, %v380
        %v382 = vmul.f32 %v377, %v381
        %v383 = vmul.f32 %v292, %v382
        %vm384 = vcmp.eq.f32.partialorder %v292, inf
        %v385 = vsel %vm384, %v292, %v383
        %vm386 = vcmp.eq.f32.partialorder %v292, 0.0
        %v387 = vand.u32 %v292, 2147483648
        %v388 = vsel %vm386, %v387, %v385
        %389 = vst [vmem:[%s135] sm:$0xff] %v304
        %390 = vst [vmem:[%s135 + $0x8] sm:$0xff] %v316
        %391 = vst [vmem:[%s135 + $0x10] sm:$0xff] %v328
        %392 = vst [vmem:[%s135 + $0x18] sm:$0xff] %v340
        %393 = vst [vmem:[%s135 + $0x20] sm:$0xff] %v352
        %394 = vst [vmem:[%s135 + $0x28] sm:$0xff] %v364
        %395 = vst [vmem:[%s135 + $0x30] sm:$0xff] %v376
        %396 = vst [vmem:[%s135 + $0x38] sm:$0xff] %v388
        %s397 = sand.u32 %s52, 1
        %s398 = scalar_lea.sflag [#allocation4], %s397
        %s399 = sand.u32 %s52, 1
        %s400 = smul.addr %s399, 64
        %s401 = scalar_lea.vmem [#allocation5], %s400
        // Predicated region
        $region29: #{tpu_custom_call.1} parent=23 // pred_check
          %p402 = pneg %p62
        $region30: #{tpu_custom_call.1} parent=23 // pred_check_branch
          %404 = sbr.rel (%p402) target = $region32
        $region31: #{tpu_custom_call.1} parent=23 // pred_region
          %406 = vsyncadd %s398, 0
          %s407 = smul.addr %s18, 8
          %s408 = scalar_lea.hbm %s1, %s407
          %s409 = sshll.u32 %s401, 4
          %s410 = int_to_ptr.vmem [resolvable:$true] %s409
          %s411 = sshll.u32 %s408, 4
          %s412 = int_to_ptr.hbm [resolvable:$true] %s411
          %417 = dma.vmem_to_hbm [thread:$0]  %s410, 1024, %s412, %s398, 128, 256, 8
        $region32: #{tpu_custom_call.1} parent=23 // pred_fallthru
          _
      $region24: #{tpu_custom_call.1} parent=5 // pred_fallthru
        _
      %p418 = scmp.le.s32.totalorder 2, %s13
      // Predicated region
      $region33: #{tpu_custom_call.1} parent=5 // pred_check
        %p419 = pneg %p418
      $region34: #{tpu_custom_call.1} parent=5 // pred_check_branch
        %421 = sbr.rel (%p419) target = $region36
      $region35: #{tpu_custom_call.1} parent=5 // pred_region
        %s422 = ssub.s32 %s13, 2
        // Predicated region
        $region37: #{tpu_custom_call.1} parent=35 // pred_check
          %p423 = pneg %p68
        $region38: #{tpu_custom_call.1} parent=35 // pred_check_branch
          %425 = sbr.rel (%p423) target = $region40
        $region39: #{tpu_custom_call.1} parent=35 // pred_region
          %s426 = sand.u32 %s53, 1
          %s427 = scalar_lea.sflag [#allocation4], %s426
          %s428 = sand.u32 %s53, 1
          %s429 = smul.addr %s428, 64
          %s430 = scalar_lea.vmem [#allocation5], %s429
          %432 = dma.done %s427, 1024
        $region40: #{tpu_custom_call.1} parent=35 // pred_fallthru
          _
      $region36: #{tpu_custom_call.1} parent=5 // pred_fallthru
        _
    $region6: #{tpu_custom_call.1} parent=1 // loop_footer
      %s17 = sadd.s32 1, %s13
    $region7: #{tpu_custom_call.1} parent=1 // loop_footer_branch
      %12 = sbr.rel target = $region3
    $region8: #{tpu_custom_call.1} parent=1 // loop_exit
      _
    %433 = vsyncpa [#allocation3], 1
    %s434 = scalar_lea.sflag [#allocation3], 1
    %435 = vsyncpa %s434, 1
    %436 = vsyncpa [#allocation4], 1
    %s437 = scalar_lea.sflag [#allocation4], 1
    %438 = vsyncpa %s437, 1

</llo_original>
